<compile_context>
chip_gen: v5e
topology: v5e:2x2
jax: 0.10.0
libtpu: 0.0.40
codegen_flags: <defaults>
</compile_context>

<pallas_src>
import functools

import jax
import jax.numpy as jnp
from jax.experimental import pallas as pl
from jax.experimental.pallas import tpu as pltpu


def _layernorm_kernel(x_ref, gamma_ref, beta_ref, o_ref, *, eps, hid):
    # x_ref: [TM, hid] tile. Upcast to f32 in-register for stable statistics.
    x = x_ref[...].astype(jnp.float32)

    # mean = x.mean(-1, keepdim=True)
    mean = jnp.sum(x, axis=-1, keepdims=True) * (1.0 / hid)
    centered = x - mean

    # torch.std uses Bessel's correction: var = sum((x - mean)^2) / (hid - 1)
    inv_nm1 = (1.0 / (hid - 1)) if hid > 1 else float("inf")
    var_unbiased = jnp.sum(centered * centered, axis=-1, keepdims=True) * inv_nm1
    std = jnp.sqrt(var_unbiased)

    # eps is added to STD (not variance), exactly as in the torch module.
    # Per-row reciprocal + broadcast multiply instead of a per-element divide.
    inv = pl.reciprocal(std + eps, approx=False)

    gamma = gamma_ref[...].astype(jnp.float32)   # [1, hid]
    beta = beta_ref[...].astype(jnp.float32)     # [1, hid]
    o_ref[...] = (gamma * (centered * inv) + beta).astype(o_ref.dtype)


def layer_norm(x, gamma, beta, eps=1e-12, *, io_budget_bytes=16 * 1024 * 1024):
    """x: [..., hidden]; gamma, beta: [hidden]."""
    orig_shape = x.shape
    hid = int(orig_shape[-1])
    rows = 1
    for d in orig_shape[:-1]:
        rows *= int(d)

    dtype = x.dtype
    itemsize = jnp.dtype(dtype).itemsize
    sub = 16 if itemsize == 2 else 8                 # sublane packing (bf16/fp16: 16)
    hid_lanes = ((hid + 127) // 128) * 128           # in-VMEM lane footprint per row

    # Row tile: largest multiple of `sub` whose double-buffered in+out tiles fit
    # the IO budget (2 bufs x (in + out) = 4 tiles); budget in f32 footprint to
    # leave room for the in-kernel f32 intermediates. Capped at 1024 rows.
    tm = io_budget_bytes // (4 * hid_lanes * max(itemsize, 4))
    tm = max(sub, min(1024, (tm // sub) * sub))
    tm = min(tm, max(sub, ((rows + sub - 1) // sub) * sub))

    x2d = x.reshape(rows, hid)
    g2d = gamma.reshape(1, hid)
    b2d = beta.reshape(1, hid)

    kernel = functools.partial(_layernorm_kernel, eps=float(eps), hid=hid)

    out = pl.pallas_call(
        kernel,
        out_shape=jax.ShapeDtypeStruct((rows, hid), dtype),
        grid=(pl.cdiv(rows, tm),),
        in_specs=[
            pl.BlockSpec((tm, hid), lambda i: (i, 0)),   # x row-tile (pipelined)
            pl.BlockSpec((1, hid), lambda i: (0, 0)),    # gamma (VMEM-resident)
            pl.BlockSpec((1, hid), lambda i: (0, 0)),    # beta  (VMEM-resident)
        ],
        out_specs=pl.BlockSpec((tm, hid), lambda i: (i, 0)),
        compiler_params=pltpu.CompilerParams(
            dimension_semantics=("parallel",),           # 2 TCs on v7x
            vmem_limit_bytes=48 * 1024 * 1024,           # safe on v5e/v6e/v7x
        ),
    )(x2d, g2d, b2d)

    return out.reshape(orig_shape)


if __name__ == "__main__":
    # Small shapes consistent with a transformer LayerNorm: [batch, seq, hidden]
    batch, seq, hid_dim = 2, 8, 32
    key = jax.random.PRNGKey(0)
    x = jax.random.normal(key, (batch, seq, hid_dim), dtype=jnp.float32)

    # nn.Parameter(torch.ones(hid_dim)) / torch.zeros(hid_dim)
    gamma = jnp.ones((hid_dim,), dtype=jnp.float32)
    beta = jnp.zeros((hid_dim,), dtype=jnp.float32)

    out = layer_norm(x, gamma, beta, eps=1e-12)
    jax.block_until_ready(out)

    # Pure-JAX reference (same unbiased-std + eps-on-std semantics as the module)
    mean = jnp.mean(x, axis=-1, keepdims=True)
    var_u = jnp.sum((x - mean) ** 2, axis=-1, keepdims=True) / (hid_dim - 1)
    ref = gamma * ((x - mean) / (jnp.sqrt(var_u) + 1e-12)) + beta
    assert jnp.allclose(out, ref, atol=1e-5, rtol=1e-5), float(jnp.max(jnp.abs(out - ref)))

    print("KERNEL_OK")
</pallas_src>

<mosaic_0001>
module attributes {stable_mosaic.version = 11 : i64} {
  func.func @_layernorm_kernel(%arg0: i32, %arg1: memref<16x32xf32, #tpu.memory_space<vmem>>, %arg2: memref<1x32xf32, #tpu.memory_space<vmem>>, %arg3: memref<1x32xf32, #tpu.memory_space<vmem>>, %arg4: memref<16x32xf32, #tpu.memory_space<vmem>>) attributes {dimension_semantics = [#tpu.dimension_semantics<parallel>], iteration_bounds = array<i64: 1>, scalar_prefetch = 0 : i64, scratch_operands = 0 : i64, tpu.core_type = #tpu.core_type<tc>, window_params = [{transform_indices = @transform_0, window_bounds = array<i64: 16, 32>}, {pipeline_mode = #tpu.pipeline_mode<synchronous>, transform_indices = @transform_1, window_bounds = array<i64: 1, 32>}, {pipeline_mode = #tpu.pipeline_mode<synchronous>, transform_indices = @transform_2, window_bounds = array<i64: 1, 32>}, {transform_indices = @transform_3, window_bounds = array<i64: 16, 32>}]} {
    %c0 = arith.constant 0 : index
    %c0_0 = arith.constant 0 : index
    %0 = vector.load %arg1[%c0, %c0_0] : memref<16x32xf32, #tpu.memory_space<vmem>>, vector<16x32xf32>
    %cst = arith.constant dense<0.000000e+00> : vector<16xf32>
    %1 = vector.multi_reduction <add>, %0, %cst [1] : vector<16x32xf32> to vector<16xf32>
    %2 = vector.shape_cast %1 : vector<16xf32> to vector<16x1xf32>
    %cst_1 = arith.constant 3.125000e-02 : f32
    %3 = vector.broadcast %cst_1 : f32 to vector<16x1xf32>
    %4 = arith.mulf %2, %3 : vector<16x1xf32>
    %5 = vector.broadcast %4 : vector<16x1xf32> to vector<16x32xf32>
    %6 = arith.subf %0, %5 : vector<16x32xf32>
    %7 = arith.mulf %6, %6 : vector<16x32xf32>
    %cst_2 = arith.constant dense<0.000000e+00> : vector<16xf32>
    %8 = vector.multi_reduction <add>, %7, %cst_2 [1] : vector<16x32xf32> to vector<16xf32>
    %9 = vector.shape_cast %8 : vector<16xf32> to vector<16x1xf32>
    %cst_3 = arith.constant 0.0322580636 : f32
    %10 = vector.broadcast %cst_3 : f32 to vector<16x1xf32>
    %11 = arith.mulf %9, %10 : vector<16x1xf32>
    %12 = math.sqrt %11 : vector<16x1xf32>
    %cst_4 = arith.constant 9.99999996E-13 : f32
    %13 = vector.broadcast %cst_4 : f32 to vector<16x1xf32>
    %14 = arith.addf %12, %13 : vector<16x1xf32>
    %15 = tpu.reciprocal %14 : vector<16x1xf32> -> vector<16x1xf32>
    %c0_5 = arith.constant 0 : index
    %c0_6 = arith.constant 0 : index
    %16 = vector.load %arg2[%c0_5, %c0_6] : memref<1x32xf32, #tpu.memory_space<vmem>>, vector<1x32xf32>
    %c0_7 = arith.constant 0 : index
    %c0_8 = arith.constant 0 : index
    %17 = vector.load %arg3[%c0_7, %c0_8] : memref<1x32xf32, #tpu.memory_space<vmem>>, vector<1x32xf32>
    %18 = vector.broadcast %15 : vector<16x1xf32> to vector<16x32xf32>
    %19 = arith.mulf %6, %18 : vector<16x32xf32>
    %20 = vector.broadcast %16 : vector<1x32xf32> to vector<16x32xf32>
    %21 = arith.mulf %20, %19 : vector<16x32xf32>
    %22 = vector.broadcast %17 : vector<1x32xf32> to vector<16x32xf32>
    %23 = arith.addf %21, %22 : vector<16x32xf32>
    %c0_9 = arith.constant 0 : index
    %c0_10 = arith.constant 0 : index
    %24 = vector.load %arg4[%c0_9, %c0_10] : memref<16x32xf32, #tpu.memory_space<vmem>>, vector<16x32xf32>
    tpu.vector_store %arg4[%c0_9, %c0_10], %23 {strides = array<i32>} : memref<16x32xf32, #tpu.memory_space<vmem>>, vector<16x32xf32>,
    return
  }
  func.func @transform_0(%arg0: i32) -> (i32, i32) {
    %c0_i32 = arith.constant 0 : i32
    %c0_i32_0 = arith.constant 0 : i32
    return %arg0, %c0_i32 : i32, i32
  }
  func.func @transform_1(%arg0: i32) -> (i32, i32) {
    %c0_i32 = arith.constant 0 : i32
    %c0_i32_0 = arith.constant 0 : i32
    %c0_i32_1 = arith.constant 0 : i32
    return %c0_i32, %c0_i32_0 : i32, i32
  }
  func.func @transform_2(%arg0: i32) -> (i32, i32) {
    %c0_i32 = arith.constant 0 : i32
    %c0_i32_0 = arith.constant 0 : i32
    %c0_i32_1 = arith.constant 0 : i32
    return %c0_i32, %c0_i32_0 : i32, i32
  }
  func.func @transform_3(%arg0: i32) -> (i32, i32) {
    %c0_i32 = arith.constant 0 : i32
    %c0_i32_0 = arith.constant 0 : i32
    return %arg0, %c0_i32 : i32, i32
  }
}

</mosaic_0001>

<llo_original>
// kernel: tpu_custom_call.1
$region0: #{tpu_custom_call.1}
  #allocation0 [shape = 'u32[]', space=smem, size = 0x4, offset = 0x4, fixed_abs, tag = 'smem constant byte address 0x4 - core index']
  #allocation1 [shape = 'u32[72,128]{1,0:T(1,128)}', space=vmem, size = 0x9000, scoped, tag = 'internal scratch']
  %s0 = inlined_call_operand.hbm [shape: f32[16,32], index: 0, kind: input, shape index: {}]
  %s1 = inlined_call_operand.hbm [shape: f32[1,32], index: 1, kind: input, shape index: {}]
  %s2 = inlined_call_operand.vmem [shape: f32[1,32], index: 2, kind: input, shape index: {}]
  %s3 = inlined_call_operand.hbm [shape: f32[16,32], index: 3, kind: output, shape index: {}]
  %s4 = sld [smem:[#allocation0]]
  $region30: #{tpu_custom_call.1} parent=0
    _
  %s6 = ssub.s32 1, %s4
  %s7 = scalar_select 0, %s6, %s4
  $region1: #{tpu_custom_call.1} parent=0
    #allocation2 [shape = 'u8[8192]{0}', space=vmem, size = 0x2000, scoped, tag = 'input window, operand 0, single buffered']
    #allocation3 [shape = 's32[1]{0}', space=sflag, size = 0x4, scoped, tag = 'scoped memory for tpu_custom_call.1']
    #allocation4 [shape = 's32[1]{0}', space=sflag, size = 0x4, scoped, tag = 'scoped memory for tpu_custom_call.1']
    #allocation5 [shape = 'u8[512]{0}', space=vmem, size = 0x400, scoped, tag = 'input window, operand 1, single buffered']
    #allocation6 [shape = 's32[1]{0}', space=sflag, size = 0x4, scoped, tag = 'scoped memory for tpu_custom_call.1']
    #allocation7 [shape = 'u8[8192]{0}', space=vmem, size = 0x2000, scoped, tag = 'output window, operand 0, single buffered']
    %8 = vsyncpa [#allocation3], 0
    %9 = vsyncpa [#allocation6], 0
    %10 = vsyncpa [#allocation4], 0
    // Predicated region
    $region2: #{tpu_custom_call.1} parent=1 // pred_check
      _
    $region3: #{tpu_custom_call.1} parent=1 // pred_check_branch
      %12 = sbr.rel (0) target = $region5
    $region4: #{tpu_custom_call.1} parent=1 // pred_region
      %14 = vsyncadd [#allocation3], 0
      %s15 = sshll.u32 %s0, 4
      %s16 = int_to_ptr.hbm [resolvable:$true] %s15
      %s17 = sshll.u32 [#allocation2], 4
      %s18 = int_to_ptr.vmem [resolvable:$true] %s17
      %23 = dma.hbm_to_vmem [thread:$0]  %s16, 256, %s18, [#allocation3], 128, 128, 8
    $region5: #{tpu_custom_call.1} parent=1 // pred_fallthru
      _
    // Predicated region
    $region6: #{tpu_custom_call.1} parent=1 // pred_check
      _
    $region7: #{tpu_custom_call.1} parent=1 // pred_check_branch
      %25 = sbr.rel (0) target = $region9
    $region8: #{tpu_custom_call.1} parent=1 // pred_region
      %27 = vsyncadd [#allocation6], 0
      %s29 = sshll.u32 %s1, 4
      %s30 = int_to_ptr.hbm [resolvable:$true] %s29
      %s31 = sshll.u32 [#allocation5], 4
      %s32 = int_to_ptr.vmem [resolvable:$true] %s31
      %34 = dma.hbm_to_vmem [thread:$0]  %s30, 16, %s32, [#allocation6]
    $region9: #{tpu_custom_call.1} parent=1 // pred_fallthru
      _
    // Predicated region
    $region10: #{tpu_custom_call.1} parent=1 // pred_check
      _
    $region11: #{tpu_custom_call.1} parent=1 // pred_check_branch
      %36 = sbr.rel (0) target = $region13
    $region12: #{tpu_custom_call.1} parent=1 // pred_region
      _
    $region13: #{tpu_custom_call.1} parent=1 // pred_fallthru
      _
    // Predicated region
    $region14: #{tpu_custom_call.1} parent=1 // pred_check
      _
    $region15: #{tpu_custom_call.1} parent=1 // pred_check_branch
      %38 = sbr.rel (0) target = $region17
    $region16: #{tpu_custom_call.1} parent=1 // pred_region
      %40 = dma.done [#allocation3], 256
    $region17: #{tpu_custom_call.1} parent=1 // pred_fallthru
      _
    // Predicated region
    $region18: #{tpu_custom_call.1} parent=1 // pred_check
      _
    $region19: #{tpu_custom_call.1} parent=1 // pred_check_branch
      %42 = sbr.rel (0) target = $region21
    $region20: #{tpu_custom_call.1} parent=1 // pred_region
      %44 = dma.done [#allocation6], 16
    $region21: #{tpu_custom_call.1} parent=1 // pred_fallthru
      _
    %v45 = vld [vmem:[#allocation2] sm:$0xff]
    %v46 = vld [vmem:[#allocation2 + $0x8] sm:$0xff]
    %vm47 = vcmask 261120
    %v48 = vsel %vm47, %v45, 0.0
    %49 = vadd.xlane.f32.xlu0 %v48
    %v50 = vpop.xlane.xlu0 %49
    %v51 = vsel %vm47, %v46, 0.0
    %52 = vadd.xlane.f32.xlu0 %v51
    %v53 = vpop.xlane.xlu0 %52
    %v54 = vmul.f32 %v50, 0.03125
    %v55 = vmul.f32 %v53, 0.03125
    %v56 = vsub.f32 %v45, %v54
    %v57 = vsub.f32 %v46, %v55
    %v58 = vmul.f32 %v56, %v56
    %v59 = vmul.f32 %v57, %v57
    %v60 = vsel %vm47, %v58, 0.0
    %61 = vadd.xlane.f32.xlu0 %v60
    %v62 = vpop.xlane.xlu0 %61
    %v63 = vsel %vm47, %v59, 0.0
    %64 = vadd.xlane.f32.xlu0 %v63
    %v65 = vpop.xlane.xlu0 %64
    %v66 = vmul.f32 %v62, 0.032258064
    %v67 = vmul.f32 %v65, 0.032258064
    %v68 = vrsqrt.pop %v66
    %v69 = vmul.f32 %v68, %v66
    %v70 = vmul.f32 %v69, %v68
    %v71 = vmul.f32 0.5, %v70
    %v72 = vsub.f32 1.5, %v71
    %v73 = vmul.f32 %v68, %v72
    %v74 = vmul.f32 %v66, %v73
    %vm75 = vcmp.eq.f32.partialorder %v66, inf
    %v76 = vsel %vm75, %v66, %v74
    %vm77 = vcmp.eq.f32.partialorder %v66, 0.0
    %v78 = vand.u32 %v66, 2147483648
    %v79 = vsel %vm77, %v78, %v76
    %v80 = vrsqrt.pop %v67
    %v81 = vmul.f32 %v80, %v67
    %v82 = vmul.f32 %v81, %v80
    %v83 = vmul.f32 0.5, %v82
    %v84 = vsub.f32 1.5, %v83
    %v85 = vmul.f32 %v80, %v84
    %v86 = vmul.f32 %v67, %v85
    %vm87 = vcmp.eq.f32.partialorder %v67, inf
    %v88 = vsel %vm87, %v67, %v86
    %vm89 = vcmp.eq.f32.partialorder %v67, 0.0
    %v90 = vand.u32 %v67, 2147483648
    %v91 = vsel %vm89, %v90, %v88
    %v92 = vadd.f32 %v79, 1e-12
    %v93 = vadd.f32 %v91, 1e-12
    %v94 = vrcp.pop %v92
    %v95 = vmul.f32 %v92, %v94
    %v96 = vsub.f32 1.0, %v95
    %v97 = vmul.f32 %v94, %v96
    %v98 = vadd.f32 %v94, %v97
    %vm99 = vweird.f32 %v92
    %vm100 = vweird.f32 %v94
    %vm101 = vmor %vm99, %vm100
    %v102 = vsel %vm101, %v94, %v98
    %v103 = vand.u32 2147483647, %v92
    %vm104 = vcmp.eq.f32.partialorder %v103, 8.507059e+37
    %v105 = vand.u32 %v92, 2147483648
    %v106 = vor.u32 1.1754944e-38, %v105
    %v107 = vsel %vm104, %v106, %v102
    %v108 = vrcp.pop %v93
    %v109 = vmul.f32 %v93, %v108
    %v110 = vsub.f32 1.0, %v109
    %v111 = vmul.f32 %v108, %v110
    %v112 = vadd.f32 %v108, %v111
    %vm113 = vweird.f32 %v93
    %vm114 = vweird.f32 %v108
    %vm115 = vmor %vm113, %vm114
    %v116 = vsel %vm115, %v108, %v112
    %v117 = vand.u32 2147483647, %v93
    %vm118 = vcmp.eq.f32.partialorder %v117, 8.507059e+37
    %v119 = vand.u32 %v93, 2147483648
    %v120 = vor.u32 1.1754944e-38, %v119
    %v121 = vsel %vm118, %v120, %v116
    %v122 = vld [vmem:[#allocation5] sm:$0x1]
    %v123 = vld [vmem:[%s2] sm:$0x1]
    %v124 = vmul.f32 %v56, %v107
    %v125 = vmul.f32 %v57, %v121
    %v127 = vperm.slane %v122, 0
    %v129 = vmul.f32 %v127, %v124
    %v130 = vmul.f32 %v127, %v125
    %v132 = vperm.slane %v123, 0
    %v134 = vadd.f32 %v129, %v132
    %v135 = vadd.f32 %v130, %v132
    %136 = vst.msk [vmem:[#allocation7] sm:$0xff] %vm47, %v134
    %137 = vst.msk [vmem:[#allocation7 + $0x8] sm:$0xff] %vm47, %v135
    // Predicated region
    $region22: #{tpu_custom_call.1} parent=1 // pred_check
      _
    $region23: #{tpu_custom_call.1} parent=1 // pred_check_branch
      %139 = sbr.rel (0) target = $region25
    $region24: #{tpu_custom_call.1} parent=1 // pred_region
      %141 = vsyncadd [#allocation4], 0
      %s142 = sshll.u32 [#allocation7], 4
      %s143 = int_to_ptr.vmem [resolvable:$true] %s142
      %s144 = sshll.u32 %s3, 4
      %s145 = int_to_ptr.hbm [resolvable:$true] %s144
      %150 = dma.vmem_to_hbm [thread:$0]  %s143, 256, %s145, [#allocation4], 128, 128, 8
    $region25: #{tpu_custom_call.1} parent=1 // pred_fallthru
      _
    // Predicated region
    $region26: #{tpu_custom_call.1} parent=1 // pred_check
      _
    $region27: #{tpu_custom_call.1} parent=1 // pred_check_branch
      %152 = sbr.rel (0) target = $region29
    $region28: #{tpu_custom_call.1} parent=1 // pred_region
      %154 = dma.done [#allocation4], 256
    $region29: #{tpu_custom_call.1} parent=1 // pred_fallthru
      _
    %155 = vsyncpa [#allocation3], 1
    %156 = vsyncpa [#allocation6], 1
    %157 = vsyncpa [#allocation4], 1

</llo_original>
